<compile_context>
chip_gen: v6e
topology: v6e:2x2x1
jax: 0.10.0
libtpu: 0.0.40
codegen_flags: <defaults>
</compile_context>

<pallas_src>
import functools

import jax
import jax.numpy as jnp
from jax.experimental import pallas as pl
from jax.experimental.pallas import tpu as pltpu


def _eca_kernel(x_ref, w_ref, o_ref, *, k_size, inv_hw):
    # x_ref: (Bt, C, HWp) input tile (input dtype; spatial zero-padded)
    # w_ref: (k,) f32 conv taps in SMEM
    # o_ref: (Bt, C, HWp)
    x = x_ref[...]                                    # keep input dtype
    bt, c, _ = x.shape
    pad = (k_size - 1) // 2

    # Global average pool over (padded) spatial dim; zeros in the padding do
    # not affect the sum, and we divide by the true H*W.  Accumulate in f32.
    pooled = jnp.sum(x, axis=2, dtype=jnp.float32) * inv_hw        # (Bt, C)

    # k-tap 1-D conv across channels with zero padding, as k shifted FMAs.
    # pltpu.roll is circular, so mask the wrap-around channels to emulate the
    # zero padding of Conv1d.
    ch = jax.lax.broadcasted_iota(jnp.int32, (bt, c), 1)           # channel idx
    conv = jnp.zeros((bt, c), jnp.float32)
    for j in range(k_size):
        d = j - pad                       # conv[b, i] += w[j] * pooled[b, i+d]
        if d == 0:
            tap = pooled
        else:
            rolled = pltpu.roll(pooled, shift=(-d) % c, axis=1)
            valid = (ch + d >= 0) & (ch + d < c)
            tap = jnp.where(valid, rolled, jnp.float32(0.0))
        conv = conv + w_ref[j] * tap

    gate = jax.nn.sigmoid(conv).astype(x.dtype)                    # (Bt, C)
    o_ref[...] = (x * gate[:, :, None]).astype(o_ref.dtype)


def _choose_batch_tile(b, bytes_per_batch, target_bytes=2 * 1024 * 1024):
    """Largest divisor of b whose block stays <= target and keeps >=2 steps."""
    bt = 1
    for cand in range(1, b + 1):
        if b % cand:
            continue
        if cand * bytes_per_batch > target_bytes:
            break
        if b >= 2 and b // cand < 2:      # keep >=2 grid steps (v7x: 2 TCs)
            continue
        bt = cand
    return bt


def eca_forward(x, conv_w, k_size=3):
    """x: [B, C, H, W], conv_w: [k] (Conv1d weight, no bias)."""
    B, C, H, W = x.shape
    HW = H * W
    HWp = max(128, ((HW + 127) // 128) * 128)         # lane-dense last dim

    xr = x.reshape(B, C, HW)
    if HWp != HW:
        xr = jnp.pad(xr, ((0, 0), (0, 0), (0, HWp - HW)))

    itemsize = jnp.dtype(x.dtype).itemsize
    bytes_per_batch = C * HWp * itemsize
    bt = _choose_batch_tile(B, bytes_per_batch)
    grid = (B // bt,)
    block_bytes = bt * bytes_per_batch
    # double-buffered in + out plus headroom; explicit so v5e (16 MiB default
    # scoped) / v7x (64 MiB physical) behave the same as v6e.
    vmem_limit = int(min(96 * 2**20, max(16 * 2**20, 6 * block_bytes)))

    kernel = functools.partial(_eca_kernel, k_size=k_size, inv_hw=1.0 / HW)

    out = pl.pallas_call(
        kernel,
        out_shape=jax.ShapeDtypeStruct((B, C, HWp), x.dtype),
        grid_spec=pltpu.PrefetchScalarGridSpec(
            num_scalar_prefetch=0,
            grid=grid,
            in_specs=[
                pl.BlockSpec((bt, C, HWp), lambda b: (b, 0, 0)),
                pl.BlockSpec(memory_space=pltpu.MemorySpace.SMEM),
            ],
            out_specs=pl.BlockSpec((bt, C, HWp), lambda b: (b, 0, 0)),
        ),
        compiler_params=pltpu.CompilerParams(
            dimension_semantics=("parallel",),
            vmem_limit_bytes=vmem_limit,
        ),
    )(xr, conv_w.astype(jnp.float32))

    if HWp != HW:
        out = out[:, :, :HW]
    return out.reshape(B, C, H, W)


def _ref_eca(x, w, k_size=3):
    """Pure-JAX reference matching the PyTorch module."""
    B, C, H, W = x.shape
    pad = (k_size - 1) // 2
    y = x.mean(axis=(2, 3))                               # (B, C)
    yp = jnp.pad(y, ((0, 0), (pad, pad)))                 # zero padding
    conv = sum(w[j] * yp[:, j:j + C] for j in range(k_size))
    g = jax.nn.sigmoid(conv)
    return x * g[:, :, None, None]


if __name__ == "__main__":
    key = jax.random.PRNGKey(0)
    kx, kw = jax.random.split(key)

    # Input [B, D, N, T] per the module docstring.  H*W = 192 exercises the
    # lane-dense padding path (padded to 256).
    B, C, H, W = 2, 8, 16, 12
    k_size = 3
    x = jax.random.normal(kx, (B, C, H, W), dtype=jnp.float32)

    # Conv1d(1, 1, k, bias=False) weight (PyTorch default uniform init bound).
    bound = 1.0 / (k_size ** 0.5)
    conv_w = jax.random.uniform(kw, (k_size,), dtype=jnp.float32,
                                minval=-bound, maxval=bound)

    out = jax.block_until_ready(eca_forward(x, conv_w, k_size=k_size))

    ref = _ref_eca(x, conv_w, k_size=k_size)
    assert out.shape == x.shape and out.dtype == x.dtype
    assert jnp.allclose(out, ref, atol=1e-5, rtol=1e-5), "mismatch vs reference"

    print("KERNEL_OK")
</pallas_src>

<mosaic_0001>
module attributes {stable_mosaic.version = 11 : i64} {
  func.func @_eca_kernel(%arg0: i32, %arg1: memref<1x8x256xf32, #tpu.memory_space<vmem>>, %arg2: memref<3xf32, #tpu.memory_space<smem>>, %arg3: memref<1x8x256xf32, #tpu.memory_space<vmem>>) attributes {dimension_semantics = [#tpu.dimension_semantics<parallel>], iteration_bounds = array<i64: 2>, scalar_prefetch = 0 : i64, scratch_operands = 0 : i64, tpu.core_type = #tpu.core_type<tc>, window_params = [{transform_indices = @transform_0, window_bounds = array<i64: 1, 8, 256>}, {transform_indices = @transform_1, window_bounds = array<i64: 3>}, {transform_indices = @transform_2, window_bounds = array<i64: 1, 8, 256>}]} {
    %c0 = arith.constant 0 : index
    %c0_0 = arith.constant 0 : index
    %c0_1 = arith.constant 0 : index
    %0 = vector.load %arg1[%c0, %c0_0, %c0_1] : memref<1x8x256xf32, #tpu.memory_space<vmem>>, vector<1x8x256xf32>
    %cst = arith.constant dense<0.000000e+00> : vector<1x8xf32>
    %1 = vector.multi_reduction <add>, %0, %cst [2] : vector<1x8x256xf32> to vector<1x8xf32>
    %cst_2 = arith.constant 0.00520833349 : f32
    %2 = vector.broadcast %cst_2 : f32 to vector<1x8xf32>
    %3 = arith.mulf %1, %2 : vector<1x8xf32>
    %4 = tpu.iota {dimensions = array<i32: 1>} : vector<1x8xi32>
    %cst_3 = arith.constant 0.000000e+00 : f32
    %5 = vector.broadcast %cst_3 : f32 to vector<1x8xf32>
    %c1_i32 = arith.constant 1 : i32
    %6 = tpu.dynamic_rotate %3 by %c1_i32 dim 1 : vector<1x8xf32>, i32 -> vector<1x8xf32>
    %c-1_i32 = arith.constant -1 : i32
    %7 = vector.broadcast %c-1_i32 : i32 to vector<1x8xi32>
    %8 = arith.addi %4, %7 : vector<1x8xi32>
    %c0_i32 = arith.constant 0 : i32
    %9 = vector.broadcast %c0_i32 : i32 to vector<1x8xi32>
    %10 = arith.cmpi sge, %8, %9 : vector<1x8xi32>
    %c-1_i32_4 = arith.constant -1 : i32
    %11 = vector.broadcast %c-1_i32_4 : i32 to vector<1x8xi32>
    %12 = arith.addi %4, %11 : vector<1x8xi32>
    %c8_i32 = arith.constant 8 : i32
    %13 = vector.broadcast %c8_i32 : i32 to vector<1x8xi32>
    %14 = arith.cmpi slt, %12, %13 : vector<1x8xi32>
    %15 = arith.andi %10, %14 : vector<1x8xi1>
    %cst_5 = arith.constant 0.000000e+00 : f32
    %16 = vector.broadcast %cst_5 : f32 to vector<1x8xf32>
    %17 = arith.select %15, %6, %16 : vector<1x8xi1>, vector<1x8xf32>
    %c0_6 = arith.constant 0 : index
    %18 = memref.load %arg2[%c0_6] : memref<3xf32, #tpu.memory_space<smem>>
    %19 = vector.broadcast %18 : f32 to vector<1x8xf32>
    %20 = arith.mulf %19, %17 : vector<1x8xf32>
    %21 = arith.addf %5, %20 : vector<1x8xf32>
    %c1 = arith.constant 1 : index
    %22 = memref.load %arg2[%c1] : memref<3xf32, #tpu.memory_space<smem>>
    %23 = vector.broadcast %22 : f32 to vector<1x8xf32>
    %24 = arith.mulf %23, %3 : vector<1x8xf32>
    %25 = arith.addf %21, %24 : vector<1x8xf32>
    %c7_i32 = arith.constant 7 : i32
    %26 = tpu.dynamic_rotate %3 by %c7_i32 dim 1 : vector<1x8xf32>, i32 -> vector<1x8xf32>
    %c1_i32_7 = arith.constant 1 : i32
    %27 = vector.broadcast %c1_i32_7 : i32 to vector<1x8xi32>
    %28 = arith.addi %4, %27 : vector<1x8xi32>
    %c0_i32_8 = arith.constant 0 : i32
    %29 = vector.broadcast %c0_i32_8 : i32 to vector<1x8xi32>
    %30 = arith.cmpi sge, %28, %29 : vector<1x8xi32>
    %c1_i32_9 = arith.constant 1 : i32
    %31 = vector.broadcast %c1_i32_9 : i32 to vector<1x8xi32>
    %32 = arith.addi %4, %31 : vector<1x8xi32>
    %c8_i32_10 = arith.constant 8 : i32
    %33 = vector.broadcast %c8_i32_10 : i32 to vector<1x8xi32>
    %34 = arith.cmpi slt, %32, %33 : vector<1x8xi32>
    %35 = arith.andi %30, %34 : vector<1x8xi1>
    %cst_11 = arith.constant 0.000000e+00 : f32
    %36 = vector.broadcast %cst_11 : f32 to vector<1x8xf32>
    %37 = arith.select %35, %26, %36 : vector<1x8xi1>, vector<1x8xf32>
    %c2 = arith.constant 2 : index
    %38 = memref.load %arg2[%c2] : memref<3xf32, #tpu.memory_space<smem>>
    %39 = vector.broadcast %38 : f32 to vector<1x8xf32>
    %40 = arith.mulf %39, %37 : vector<1x8xf32>
    %41 = arith.addf %25, %40 : vector<1x8xf32>
    %42 = arith.negf %41 : vector<1x8xf32>
    %43 = math.exp %42 : vector<1x8xf32>
    %cst_12 = arith.constant 1.000000e+00 : f32
    %44 = vector.broadcast %cst_12 : f32 to vector<1x8xf32>
    %45 = arith.addf %44, %43 : vector<1x8xf32>
    %46 = arith.divf %44, %45 : vector<1x8xf32>
    %47 = vector.shape_cast %46 : vector<1x8xf32> to vector<1x8x1xf32>
    %48 = vector.broadcast %47 : vector<1x8x1xf32> to vector<1x8x256xf32>
    %49 = arith.mulf %0, %48 : vector<1x8x256xf32>
    %c0_13 = arith.constant 0 : index
    %c0_14 = arith.constant 0 : index
    %c0_15 = arith.constant 0 : index
    %50 = vector.load %arg3[%c0_13, %c0_14, %c0_15] : memref<1x8x256xf32, #tpu.memory_space<vmem>>, vector<1x8x256xf32>
    tpu.vector_store %arg3[%c0_13, %c0_14, %c0_15], %49 {strides = array<i32>} : memref<1x8x256xf32, #tpu.memory_space<vmem>>, vector<1x8x256xf32>,
    return
  }
  func.func @transform_0(%arg0: i32) -> (i32, i32, i32) {
    %c0_i32 = arith.constant 0 : i32
    %c0_i32_0 = arith.constant 0 : i32
    %c0_i32_1 = arith.constant 0 : i32
    return %arg0, %c0_i32, %c0_i32_0 : i32, i32, i32
  }
  func.func @transform_1(%arg0: i32) -> i32 {
    %c0_i32 = arith.constant 0 : i32
    %c0_i32_0 = arith.constant 0 : i32
    return %c0_i32 : i32
  }
  func.func @transform_2(%arg0: i32) -> (i32, i32, i32) {
    %c0_i32 = arith.constant 0 : i32
    %c0_i32_0 = arith.constant 0 : i32
    %c0_i32_1 = arith.constant 0 : i32
    return %arg0, %c0_i32, %c0_i32_0 : i32, i32, i32
  }
}

</mosaic_0001>

<llo_original>
// kernel: tpu_custom_call.1
$region0: #{tpu_custom_call.1}
  #allocation0 [shape = 'u32[]', space=smem, size = 0x4, offset = 0x4, fixed_abs, tag = 'smem constant byte address 0x4 - core index']
  #allocation1 [shape = 'u32[144,128]{1,0:T(1,128)}', space=vmem, size = 0x12000, scoped, tag = 'internal scratch']
  %s0 = inlined_call_operand.hbm [shape: f32[2,8,256], index: 0, kind: input, shape index: {}]
  %s1 = inlined_call_operand.vmem [shape: f32[3], index: 1, kind: input, shape index: {}]
  %s2 = inlined_call_operand.hbm [shape: f32[2,8,256], index: 2, kind: output, shape index: {}]
  %s3 = sld [smem:[#allocation0]]
  $region49: #{tpu_custom_call.1} parent=0
    _
  %s5 = ssub.s32 1, %s3
  %s6 = scalar_select 0, %s5, %s3
  $region1: #{tpu_custom_call.1} parent=0
    #allocation2 [shape = 'u8[16384]{0}', space=vmem, size = 0x4000, scoped, tag = 'input window, operand 0']
    #allocation3 [shape = 's32[2]{0}', space=sflag, size = 0x8, scoped, tag = 'scoped memory for tpu_custom_call.1']
    #allocation4 [shape = 's32[2]{0}', space=sflag, size = 0x8, scoped, tag = 'scoped memory for tpu_custom_call.1']
    #allocation5 [shape = 's32[2]{0}', space=sflag, size = 0x8, scoped, tag = 'scoped memory for tpu_custom_call.1']
    #allocation6 [shape = 'u8[512]{0}', space=smem, size = 0x200, scoped, tag = 'input window, operand 1, single buffered']
    #allocation7 [shape = 'u8[16384]{0}', space=vmem, size = 0x4000, scoped, tag = 'output window, operand 0']
    %7 = vsyncpa [#allocation3], 0
    %s8 = scalar_lea.sflag [#allocation3], 1
    %9 = vsyncpa %s8, 0
    %10 = vsyncpa [#allocation5], 0
    %11 = vsyncpa [#allocation4], 0
    %s12 = scalar_lea.sflag [#allocation4], 1
    %13 = vsyncpa %s12, 0
    loop: start=0, step=1, limit=4
    $region2: #{tpu_custom_call.1} parent=1 // loop_pre_header
      _
    $region3: #{tpu_custom_call.1} parent=1 // loop_header
      %s15 = sphi 0, %s19
      %p16 = scmp.ge.s32.totalorder %s15, 4
      %s25 = sphi 0, %s27
      %s28 = sphi 0, %s25
      %s29 = sphi 0, %s28
      %s45 = sphi 0, %s29
      %s49 = sphi 0, %s49
      %s51 = sphi 0, %s49
      %s52 = sphi 0, %s51
      %s66 = sphi 0, %s52
      %s72 = sphi 0, %s74
      %s75 = sphi 0, %s72
      %s76 = sphi 0, %s75
      %s92 = sphi 0, %s76
    $region4: #{tpu_custom_call.1} parent=1 // loop_header_branch
      %18 = sbr.rel (%p16) target = $region8
    $region5: #{tpu_custom_call.1} parent=1 // loop_body
      %s20 = ssub.s32 %s15, 1
      %s21 = ssub.s32 %s15, 2
      %s22 = sadd.s32 %s15, 1
      %s23 = ssub.s32 %s15, %s22
      %p24 = scmp.eq.s32.totalorder %s23, 0
      %s26 = sadd.s32 %s25, 1
      %s27 = scalar_select %p24, %s25, %s26
      %p30 = pneg %p24
      %p31 = scmp.eq.s32.totalorder %s15, 1
      %p32 = por %p30, %p31
      %p33 = scmp.ne.s32.totalorder %s25, %s28
      %p34 = scmp.eq.s32.totalorder %s15, 0
      %p35 = por %p33, %p34
      %p36 = scmp.ne.s32.totalorder %s25, %s28
      %p37 = scmp.eq.s32.totalorder %s20, 1
      %p38 = por %p36, %p37
      %p39 = scmp.ne.s32.totalorder %s28, %s29
      %p40 = scmp.eq.s32.totalorder %s20, 0
      %p41 = por %p39, %p40
      %p42 = scmp.ne.s32.totalorder %s28, %s29
      %p43 = scmp.eq.s32.totalorder %s21, 1
      %p44 = por %p42, %p43
      %p46 = scmp.ne.s32.totalorder %s29, %s45
      %p47 = scmp.eq.s32.totalorder %s21, 0
      %p48 = por %p46, %p47
      %s50 = sadd.s32 %s49, 1
      %p53 = scmp.eq.s32.totalorder %s15, 1
      %p54 = scmp.ne.s32.totalorder %s49, %s51
      %p55 = scmp.eq.s32.totalorder %s15, 0
      %p56 = por %p54, %p55
      %p57 = scmp.ne.s32.totalorder %s49, %s51
      %p58 = scmp.eq.s32.totalorder %s20, 1
      %p59 = por %p57, %p58
      %p60 = scmp.ne.s32.totalorder %s51, %s52
      %p61 = scmp.eq.s32.totalorder %s20, 0
      %p62 = por %p60, %p61
      %p63 = scmp.ne.s32.totalorder %s51, %s52
      %p64 = scmp.eq.s32.totalorder %s21, 1
      %p65 = por %p63, %p64
      %p67 = scmp.ne.s32.totalorder %s52, %s66
      %p68 = scmp.eq.s32.totalorder %s21, 0
      %p69 = por %p67, %p68
      %s70 = ssub.s32 %s15, %s22
      %p71 = scmp.eq.s32.totalorder %s70, 0
      %s73 = sadd.s32 %s72, 1
      %s74 = scalar_select %p71, %s72, %s73
      %p77 = pneg %p71
      %p78 = scmp.eq.s32.totalorder %s15, 1
      %p79 = por %p77, %p78
      %p80 = scmp.ne.s32.totalorder %s72, %s75
      %p81 = scmp.eq.s32.totalorder %s15, 0
      %p82 = por %p80, %p81
      %p83 = scmp.ne.s32.totalorder %s72, %s75
      %p84 = scmp.eq.s32.totalorder %s20, 1
      %p85 = por %p83, %p84
      %p86 = scmp.ne.s32.totalorder %s75, %s76
      %p87 = scmp.eq.s32.totalorder %s20, 0
      %p88 = por %p86, %p87
      %p89 = scmp.ne.s32.totalorder %s75, %s76
      %p90 = scmp.eq.s32.totalorder %s21, 1
      %p91 = por %p89, %p90
      %p93 = scmp.ne.s32.totalorder %s76, %s92
      %p94 = scmp.eq.s32.totalorder %s21, 0
      %p95 = por %p93, %p94
      %p96 = scmp.le.s32.totalorder 1, %s15
      %p97 = scmp.lt.s32.totalorder %s15, 3
      %p98 = pnand %p96, %p97
      %p99 = pneg %p98
      // Predicated region
      $region9: #{tpu_custom_call.1} parent=5 // pred_check
        _
      $region10: #{tpu_custom_call.1} parent=5 // pred_check_branch
        %101 = sbr.rel (%p98) target = $region12
      $region11: #{tpu_custom_call.1} parent=5 // pred_region
        %s102 = ssub.s32 %s15, 1
        // Predicated region
        $region13: #{tpu_custom_call.1} parent=11 // pred_check
          %p103 = pneg %p62
        $region14: #{tpu_custom_call.1} parent=11 // pred_check_branch
          %105 = sbr.rel (%p103) target = $region16
        $region15: #{tpu_custom_call.1} parent=11 // pred_region
          %s107 = ssub.s32 16, 16
          %108 = vsyncadd [#allocation5], %s107
          %s110 = sshll.u32 %s1, 4
          %s111 = int_to_ptr.vmem [resolvable:$true] %s110
          %113 = dma.vmem_to_smem %s111, 16, [#allocation6], [#allocation5]
        $region16: #{tpu_custom_call.1} parent=11 // pred_fallthru
          _
      $region12: #{tpu_custom_call.1} parent=5 // pred_fallthru
        _
      %p114 = scmp.lt.s32.totalorder %s15, 2
      // Predicated region
      $region17: #{tpu_custom_call.1} parent=5 // pred_check
        %p115 = pneg %p114
      $region18: #{tpu_custom_call.1} parent=5 // pred_check_branch
        %117 = sbr.rel (%p115) target = $region20
      $region19: #{tpu_custom_call.1} parent=5 // pred_region
        // Predicated region
        $region21: #{tpu_custom_call.1} parent=19 // pred_check
          %p118 = pneg %p35
        $region22: #{tpu_custom_call.1} parent=19 // pred_check_branch
          %120 = sbr.rel (%p118) target = $region24
        $region23: #{tpu_custom_call.1} parent=19 // pred_region
          %s121 = sand.u32 %s25, 1
          %s122 = scalar_lea.sflag [#allocation3], %s121
          %s123 = sand.u32 %s25, 1
          %s124 = smul.addr %s123, 16
          %s125 = scalar_lea.vmem [#allocation2], %s124
          %s127 = ssub.s32 256, 256
          %128 = vsyncadd %s122, %s127
          %s129 = smul.addr %s15, 2
          %s130 = smul.addr %s129, 128
          %s131 = scalar_lea.hbm %s0, %s130
          %s133 = sshll.u32 %s125, 4
          %s134 = int_to_ptr.vmem [resolvable:$true] %s133
          %136 = dma.hbm_to_vmem [thread:$0]  %s131, 256, %s134, %s122
        $region24: #{tpu_custom_call.1} parent=19 // pred_fallthru
          _
      $region20: #{tpu_custom_call.1} parent=5 // pred_fallthru
        _
      %p137 = scmp.le.s32.totalorder 1, %s15
      %p138 = scmp.lt.s32.totalorder %s15, 3
      %p139 = pnand %p137, %p138
      %p140 = pneg %p139
      // Predicated region
      $region25: #{tpu_custom_call.1} parent=5 // pred_check
        _
      $region26: #{tpu_custom_call.1} parent=5 // pred_check_branch
        %142 = sbr.rel (%p139) target = $region28
      $region27: #{tpu_custom_call.1} parent=5 // pred_region
        %s143 = ssub.s32 %s15, 1
        %s144 = sand.u32 %s28, 1
        %s145 = scalar_lea.sflag [#allocation3], %s144
        %s146 = sand.u32 %s28, 1
        %s147 = smul.addr %s146, 16
        %s148 = scalar_lea.vmem [#allocation2], %s147
        // Predicated region
        $region29: #{tpu_custom_call.1} parent=27 // pred_check
          %p149 = pneg %p41
        $region30: #{tpu_custom_call.1} parent=27 // pred_check_branch
          %151 = sbr.rel (%p149) target = $region32
        $region31: #{tpu_custom_call.1} parent=27 // pred_region
          %152 = dma.done %s145, 256
        $region32: #{tpu_custom_call.1} parent=27 // pred_fallthru
          _
        // Predicated region
        $region33: #{tpu_custom_call.1} parent=27 // pred_check
          %p153 = pneg %p62
        $region34: #{tpu_custom_call.1} parent=27 // pred_check_branch
          %155 = sbr.rel (%p153) target = $region36
        $region35: #{tpu_custom_call.1} parent=27 // pred_region
          %156 = dma.done [#allocation5], 16
        $region36: #{tpu_custom_call.1} parent=27 // pred_fallthru
          _
        %157 = sfence
        %s158 = sand.u32 %s28, 1
        %s159 = scalar_lea.sflag [#allocation3], %s158
        %s160 = sand.u32 %s28, 1
        %s161 = smul.addr %s160, 16
        %s162 = scalar_lea.vmem [#allocation2], %s161
        %p163 = pneg %p41
        %p164 = pneg %p38
        %p165 = pneg %p62
        %p166 = pneg %p59
        %p167 = pneg %p88
        %p168 = pneg %p85
        %s169 = sand.u32 %s75, 1
        %s170 = scalar_lea.sflag [#allocation4], %s169
        %s171 = sand.u32 %s75, 1
        %s172 = smul.addr %s171, 16
        %s173 = scalar_lea.vmem [#allocation7], %s172
        %v174 = vld [vmem:[%s148] sm:$0xff]
        %v175 = vld [vmem:[%s148 + $0x8] sm:$0xff]
        %v176 = vadd.f32 %v174, %v175
        %177 = vadd.xlane.f32.xlu0 %v176
        %v178 = vpop.xlane.xlu0 %177
        %v179 = vmul.f32 %v178, 0.0052083335
        %v180 = vlaneseq
        %v181 = vand.u32 %v180, 127
        %v183 = vlaneseq
        %v184 = vshrl.u32 %v183, 7
        %v185 = vsub.s32 %v181, %v184
        %v186 = vrot.slane %v179, %v185
        %vm188 = vcmask 1047616
        %189 = vrot.lane.b32.xlu0 %v186, 8
        %v190 = vpop.permute.xlu0 %189
        %v191 = vsel %vm188, %v190, %v186
        %192 = vrot.lane.b32.xlu0 %v191, 8
        %v193 = vpop.permute.xlu0 %192
        %v194 = vsel %vm188, %v193, %v186
        %v195 = vadd.s32 %v181, 4294967295
        %vm196 = vcmp.ge.s32.totalorder %v195, 0
        %vm197 = vcmp.lt.s32.totalorder %v195, 8
        %vm198 = vmand %vm196, %vm197
        %200 = vrot.lane.b32.xlu0 %v194, 121
        %v201 = vpop.permute.xlu0 %200
        %v203 = vsel %vm198, %v201, 0.0
        %s204 = sld [smem:[#allocation6]]
        %v205 = vstv %s204
        %v206 = vmul.f32 %v205, %v203
        %v207 = vadd.f32 %v206, 0.0
        %s208 = sld [smem:[#allocation6 + $0x1]]
        %v209 = vstv %s208
        %v210 = vmul.f32 %v209, %v179
        %v212 = vlaneseq
        %v213 = vshrl.u32 %v212, 7
        %v214 = vsub.s32 %v181, %v213
        %v215 = vrot.slane %v210, %v214
        %v217 = vadd.f32 %v207, %v215
        %v218 = vadd.s32 %v181, 1
        %vm219 = vcmp.ge.s32.totalorder %v218, 0
        %vm220 = vcmp.lt.s32.totalorder %v218, 8
        %vm221 = vmand %vm219, %vm220
        %222 = vrot.lane.b32.xlu0 %v194, 127
        %v223 = vpop.permute.xlu0 %222
        %v225 = vsel %vm221, %v223, 0.0
        %s226 = sld [smem:[#allocation6 + $0x2]]
        %v227 = vstv %s226
        %v228 = vmul.f32 %v227, %v225
        %v229 = vadd.f32 %v217, %v228
        %v230 = vxor.u32 %v229, 2147483648
        %v231 = vmul.f32 %v230, 1.442695
        %v232 = vpow.pop %v231
        %v233 = vadd.f32 %v232, 1.0
        %v234 = vrcp.pop %v233
        %v235 = vmul.f32 1.0, %v234
        %v236 = vlaneseq
        %v237 = vshrl.u32 %v236, 7
        %v238 = vsub.s32 0, %v237
        %v239 = vrot.slane %v235, %v238
        %241 = vbcast.lane.b32.xlu0 %v239, 256
        %v242 = vpop.permute.xlu0 %241
        %v243 = vmul.f32 %v174, %v242
        %v244 = vmul.f32 %v175, %v242
        %245 = vst [vmem:[%s173] sm:$0xff] %v243
        %246 = vst [vmem:[%s173 + $0x8] sm:$0xff] %v244
        %s247 = sand.u32 %s75, 1
        %s248 = scalar_lea.sflag [#allocation4], %s247
        %s249 = sand.u32 %s75, 1
        %s250 = smul.addr %s249, 16
        %s251 = scalar_lea.vmem [#allocation7], %s250
        // Predicated region
        $region37: #{tpu_custom_call.1} parent=27 // pred_check
          %p252 = pneg %p85
        $region38: #{tpu_custom_call.1} parent=27 // pred_check_branch
          %254 = sbr.rel (%p252) target = $region40
        $region39: #{tpu_custom_call.1} parent=27 // pred_region
          %s256 = ssub.s32 256, 256
          %257 = vsyncadd %s248, %s256
          %s258 = smul.addr %s20, 2
          %s259 = smul.addr %s258, 128
          %s260 = scalar_lea.hbm %s2, %s259
          %s262 = sshll.u32 %s251, 4
          %s263 = int_to_ptr.vmem [resolvable:$true] %s262
          %265 = dma.vmem_to_hbm [thread:$0]  %s263, 256, %s260, %s248
        $region40: #{tpu_custom_call.1} parent=27 // pred_fallthru
          _
      $region28: #{tpu_custom_call.1} parent=5 // pred_fallthru
        _
      %p266 = scmp.le.s32.totalorder 2, %s15
      // Predicated region
      $region41: #{tpu_custom_call.1} parent=5 // pred_check
        %p267 = pneg %p266
      $region42: #{tpu_custom_call.1} parent=5 // pred_check_branch
        %269 = sbr.rel (%p267) target = $region44
      $region43: #{tpu_custom_call.1} parent=5 // pred_region
        %s270 = ssub.s32 %s15, 2
        // Predicated region
        $region45: #{tpu_custom_call.1} parent=43 // pred_check
          %p271 = pneg %p91
        $region46: #{tpu_custom_call.1} parent=43 // pred_check_branch
          %273 = sbr.rel (%p271) target = $region48
        $region47: #{tpu_custom_call.1} parent=43 // pred_region
          %s274 = sand.u32 %s76, 1
          %s275 = scalar_lea.sflag [#allocation4], %s274
          %s276 = sand.u32 %s76, 1
          %s277 = smul.addr %s276, 16
          %s278 = scalar_lea.vmem [#allocation7], %s277
          %279 = dma.done %s275, 256
        $region48: #{tpu_custom_call.1} parent=43 // pred_fallthru
          _
      $region44: #{tpu_custom_call.1} parent=5 // pred_fallthru
        _
    $region6: #{tpu_custom_call.1} parent=1 // loop_footer
      %s19 = sadd.s32 1, %s15
    $region7: #{tpu_custom_call.1} parent=1 // loop_footer_branch
      %14 = sbr.rel target = $region3
    $region8: #{tpu_custom_call.1} parent=1 // loop_exit
      _
    %280 = vsyncpa [#allocation3], 1
    %s281 = scalar_lea.sflag [#allocation3], 1
    %282 = vsyncpa %s281, 1
    %283 = vsyncpa [#allocation4], 1
    %s284 = scalar_lea.sflag [#allocation4], 1
    %285 = vsyncpa %s284, 1
    %286 = vsyncpa [#allocation5], 1
    %s287 = scalar_lea.sflag [#allocation5], 1
    %288 = vsyncpa %s287, 1

</llo_original>
